<compile_context>
chip_gen: v5e
topology: v5e:2x2
jax: 0.10.0
libtpu: 0.0.40
codegen_flags: <defaults>
</compile_context>

<pallas_src>
import jax
import jax.numpy as jnp
from jax.experimental import pallas as pl
from jax.experimental.pallas import tpu as pltpu

LANE = 128  # TPU lane width; output feature dim is padded to a multiple of this.


def qnet_kernel(x_ref, w1_ref, b1_ref, w2_ref, b2_ref, out_ref):
    # hidden = relu(x @ w1 + b1)   (MXU matmul, f32 accumulate; bias+ReLU on VPU)
    h = jnp.dot(x_ref[...], w1_ref[...], preferred_element_type=jnp.float32)
    h = jnp.maximum(h + b1_ref[...], 0.0)
    # out = h @ w2 + b2            (w2/b2 zero-padded to lane-dense width)
    o = jnp.dot(h, w2_ref[...], preferred_element_type=jnp.float32)
    out_ref[...] = (o + b2_ref[...]).astype(out_ref.dtype)


def _pad_last(a, target):
    pad = target - a.shape[-1]
    if pad == 0:
        return a
    return jnp.pad(a, ((0, 0), (0, pad)))


def qnet_forward(x, w1, b1, w2, b2, *, tile_b=512):
    """Fused QNet forward.

    Small batches (B <= tile_b): single grid-less invocation, everything in VMEM.
    Large batches: batch-tiled grid, weights resident, batch axis "parallel".
    Output last dim is internally padded to a multiple of 128 (lane-dense
    stores) and sliced back before returning.
    """
    B, D_in = x.shape
    H = w1.shape[1]
    D_out = w2.shape[1]
    D_pad = ((D_out + LANE - 1) // LANE) * LANE

    w2p = _pad_last(w2, D_pad)
    b2p = _pad_last(b2, D_pad)

    if B <= tile_b:
        # Single shot: no grid, no pipeline machinery, whole arrays in VMEM.
        out = pl.pallas_call(
            qnet_kernel,
            out_shape=jax.ShapeDtypeStruct((B, D_pad), jnp.float32),
            in_specs=[pl.BlockSpec(memory_space=pltpu.MemorySpace.VMEM)] * 5,
            out_specs=pl.BlockSpec(memory_space=pltpu.MemorySpace.VMEM),
        )(x, w1, b1, w2p, b2p)
    else:
        # Batch-tiled path: tile only the batch axis; weights/biases resident
        # via constant index_maps (a few KB, re-DMA would be pure waste).
        n_tiles = pl.cdiv(B, tile_b)
        B_pad = n_tiles * tile_b
        xp = jnp.pad(x, ((0, B_pad - B), (0, 0))) if B_pad != B else x
        out = pl.pallas_call(
            qnet_kernel,
            out_shape=jax.ShapeDtypeStruct((B_pad, D_pad), jnp.float32),
            grid=(n_tiles,),
            in_specs=[
                pl.BlockSpec((tile_b, D_in), lambda i: (i, 0)),
                pl.BlockSpec((D_in, H), lambda i: (0, 0)),
                pl.BlockSpec((1, H), lambda i: (0, 0)),
                pl.BlockSpec((H, D_pad), lambda i: (0, 0)),
                pl.BlockSpec((1, D_pad), lambda i: (0, 0)),
            ],
            out_specs=pl.BlockSpec((tile_b, D_pad), lambda i: (i, 0)),
            compiler_params=pltpu.CompilerParams(
                dimension_semantics=("parallel",)),  # v7x: split batch across 2 TCs
        )(xp, w1, b1, w2p, b2p)
        out = out[:B]

    return out[:, :D_out]


def init_qnet_params(key, valor_entrada, valor_oculto, valor_saida):
    """Deterministic synthetic init (PyTorch-style uniform fan-in bounds)."""
    k1, k2, k3, k4 = jax.random.split(key, 4)
    bound1 = 1.0 / jnp.sqrt(valor_entrada)
    bound2 = 1.0 / jnp.sqrt(valor_oculto)
    # Stored already transposed: [in, out]
    w1 = jax.random.uniform(k1, (valor_entrada, valor_oculto),
                            jnp.float32, -bound1, bound1)
    b1 = jax.random.uniform(k2, (1, valor_oculto), jnp.float32, -bound1, bound1)
    w2 = jax.random.uniform(k3, (valor_oculto, valor_saida),
                            jnp.float32, -bound2, bound2)
    b2 = jax.random.uniform(k4, (1, valor_saida), jnp.float32, -bound2, bound2)
    return w1, b1, w2, b2


def qnet_reference(x, w1, b1, w2, b2):
    h = jnp.maximum(x @ w1 + b1, 0.0)
    return h @ w2 + b2


if __name__ == "__main__":
    # Shapes consistent with the module: QNet(valor_entrada=16, valor_oculto=32,
    # valor_saida=4), small batch of 8 states.
    valor_entrada, valor_oculto, valor_saida = 16, 32, 4
    batch = 8

    key = jax.random.PRNGKey(0)
    kx, kp, kx2 = jax.random.split(key, 3)
    x = jax.random.normal(kx, (batch, valor_entrada), dtype=jnp.float32)
    w1, b1, w2, b2 = init_qnet_params(kp, valor_entrada, valor_oculto, valor_saida)

    # Path 1: small batch -> grid-less, fully VMEM-resident call.
    out = jax.block_until_ready(qnet_forward(x, w1, b1, w2, b2))
    ref = qnet_reference(x, w1, b1, w2, b2)
    assert out.shape == (batch, valor_saida)
    assert jnp.allclose(out, ref, atol=1e-5, rtol=1e-5), "mismatch vs reference (small)"

    # Path 2: batch-tiled grid (non-multiple batch to exercise padding/slice).
    big_batch = 600
    xb = jax.random.normal(kx2, (big_batch, valor_entrada), dtype=jnp.float32)
    out_b = jax.block_until_ready(qnet_forward(xb, w1, b1, w2, b2, tile_b=256))
    ref_b = qnet_reference(xb, w1, b1, w2, b2)
    assert out_b.shape == (big_batch, valor_saida)
    assert jnp.allclose(out_b, ref_b, atol=1e-5, rtol=1e-5), "mismatch vs reference (tiled)"

    print("KERNEL_OK")
</pallas_src>

<mosaic_0001>
module attributes {stable_mosaic.version = 11 : i64} {
  func.func @qnet_kernel(%arg0: memref<8x16xf32, #tpu.memory_space<vmem>>, %arg1: memref<16x32xf32, #tpu.memory_space<vmem>>, %arg2: memref<1x32xf32, #tpu.memory_space<vmem>>, %arg3: memref<32x128xf32, #tpu.memory_space<vmem>>, %arg4: memref<1x128xf32, #tpu.memory_space<vmem>>, %arg5: memref<8x128xf32, #tpu.memory_space<vmem>>) attributes {dimension_semantics = [], scalar_prefetch = 0 : i64, scratch_operands = 0 : i64, tpu.core_type = #tpu.core_type<tc>} {
    %c0 = arith.constant 0 : index
    %c0_0 = arith.constant 0 : index
    %0 = vector.load %arg0[%c0, %c0_0] : memref<8x16xf32, #tpu.memory_space<vmem>>, vector<8x16xf32>
    %c0_1 = arith.constant 0 : index
    %c0_2 = arith.constant 0 : index
    %1 = vector.load %arg1[%c0_1, %c0_2] : memref<16x32xf32, #tpu.memory_space<vmem>>, vector<16x32xf32>
    %cst = arith.constant dense<0.000000e+00> : vector<8x32xf32>
    %2 = tpu.matmul %0, %1, %cst {dimension_numbers = #tpu.dot_dimension_numbers<[1], [0], [0], [1], [0, 0, 1, 1], [], []>} : vector<8x16xf32>, vector<16x32xf32>, vector<8x32xf32> -> vector<8x32xf32>
    %c0_3 = arith.constant 0 : index
    %c0_4 = arith.constant 0 : index
    %3 = vector.load %arg2[%c0_3, %c0_4] : memref<1x32xf32, #tpu.memory_space<vmem>>, vector<1x32xf32>
    %4 = vector.broadcast %3 : vector<1x32xf32> to vector<8x32xf32>
    %5 = arith.addf %2, %4 : vector<8x32xf32>
    %cst_5 = arith.constant 0.000000e+00 : f32
    %6 = vector.broadcast %cst_5 : f32 to vector<8x32xf32>
    %7 = arith.maximumf %5, %6 : vector<8x32xf32>
    %c0_6 = arith.constant 0 : index
    %c0_7 = arith.constant 0 : index
    %8 = vector.load %arg3[%c0_6, %c0_7] : memref<32x128xf32, #tpu.memory_space<vmem>>, vector<32x128xf32>
    %cst_8 = arith.constant dense<0.000000e+00> : vector<8x128xf32>
    %9 = tpu.matmul %7, %8, %cst_8 {dimension_numbers = #tpu.dot_dimension_numbers<[1], [0], [0], [1], [0, 0, 1, 1], [], []>} : vector<8x32xf32>, vector<32x128xf32>, vector<8x128xf32> -> vector<8x128xf32>
    %c0_9 = arith.constant 0 : index
    %c0_10 = arith.constant 0 : index
    %10 = vector.load %arg4[%c0_9, %c0_10] : memref<1x128xf32, #tpu.memory_space<vmem>>, vector<1x128xf32>
    %11 = vector.broadcast %10 : vector<1x128xf32> to vector<8x128xf32>
    %12 = arith.addf %9, %11 : vector<8x128xf32>
    %c0_11 = arith.constant 0 : index
    %c0_12 = arith.constant 0 : index
    %13 = vector.load %arg5[%c0_11, %c0_12] : memref<8x128xf32, #tpu.memory_space<vmem>>, vector<8x128xf32>
    tpu.vector_store %arg5[%c0_11, %c0_12], %12 {strides = array<i32>} : memref<8x128xf32, #tpu.memory_space<vmem>>, vector<8x128xf32>,
    return
  }
}

</mosaic_0001>

<llo_original>
// kernel: tpu_custom_call.1
$region0: #{tpu_custom_call.1}
  #allocation0 [shape = 'u32[]', space=smem, size = 0x4, offset = 0x4, fixed_abs, tag = 'smem constant byte address 0x4 - core index']
  #allocation1 [shape = 'u32[72,128]{1,0:T(1,128)}', space=vmem, size = 0x9000, scoped, tag = 'internal scratch']
  %s0 = inlined_call_operand.hbm [shape: f32[8,16], index: 0, kind: input, shape index: {}]
  %s1 = inlined_call_operand.hbm [shape: f32[16,32], index: 1, kind: input, shape index: {}]
  %s2 = inlined_call_operand.vmem [shape: f32[1,32], index: 2, kind: input, shape index: {}]
  %s3 = inlined_call_operand.hbm [shape: f32[32,128], index: 3, kind: input, shape index: {}]
  %s4 = inlined_call_operand.vmem [shape: f32[1,128], index: 4, kind: input, shape index: {}]
  %s5 = inlined_call_operand.hbm [shape: f32[8,128], index: 5, kind: output, shape index: {}]
  %s6 = sld [smem:[#allocation0]]
  $region42: #{tpu_custom_call.1} parent=0
    _
  %s8 = ssub.s32 1, %s6
  %s9 = scalar_select 0, %s8, %s6
  $region1: #{tpu_custom_call.1} parent=0
    #allocation2 [shape = 'u8[4096]{0}', space=vmem, size = 0x1000, scoped, tag = 'input window, operand 0, single buffered']
    #allocation3 [shape = 's32[1]{0}', space=sflag, size = 0x4, scoped, tag = 'scoped memory for tpu_custom_call.1']
    #allocation4 [shape = 's32[1]{0}', space=sflag, size = 0x4, scoped, tag = 'scoped memory for tpu_custom_call.1']
    #allocation5 [shape = 'u8[8192]{0}', space=vmem, size = 0x2000, scoped, tag = 'input window, operand 1, single buffered']
    #allocation6 [shape = 's32[1]{0}', space=sflag, size = 0x4, scoped, tag = 'scoped memory for tpu_custom_call.1']
    #allocation7 [shape = 'u8[16384]{0}', space=vmem, size = 0x4000, scoped, tag = 'input window, operand 3, single buffered']
    #allocation8 [shape = 'u8[4096]{0}', space=vmem, size = 0x1000, scoped, tag = 'output window, operand 0, single buffered']
    %10 = vsyncpa [#allocation3], 0
    %11 = vsyncpa [#allocation6], 0
    %12 = vsyncpa [#allocation4], 0
    // Predicated region
    $region2: #{tpu_custom_call.1} parent=1 // pred_check
      _
    $region3: #{tpu_custom_call.1} parent=1 // pred_check_branch
      %14 = sbr.rel (0) target = $region5
    $region4: #{tpu_custom_call.1} parent=1 // pred_region
      %16 = vsyncadd [#allocation3], 0
      %s18 = sshll.u32 %s0, 4
      %s19 = int_to_ptr.hbm [resolvable:$true] %s18
      %s20 = sshll.u32 [#allocation2], 4
      %s21 = int_to_ptr.vmem [resolvable:$true] %s20
      %23 = dma.hbm_to_vmem [thread:$0]  %s19, 128, %s21, [#allocation3]
    $region5: #{tpu_custom_call.1} parent=1 // pred_fallthru
      _
    // Predicated region
    $region6: #{tpu_custom_call.1} parent=1 // pred_check
      _
    $region7: #{tpu_custom_call.1} parent=1 // pred_check_branch
      %25 = sbr.rel (0) target = $region9
    $region8: #{tpu_custom_call.1} parent=1 // pred_region
      %27 = vsyncadd [#allocation6], 0
      %s28 = sshll.u32 %s1, 4
      %s29 = int_to_ptr.hbm [resolvable:$true] %s28
      %s30 = sshll.u32 [#allocation5], 4
      %s31 = int_to_ptr.vmem [resolvable:$true] %s30
      %36 = dma.hbm_to_vmem [thread:$0]  %s29, 256, %s31, [#allocation6], 128, 128, 8
    $region9: #{tpu_custom_call.1} parent=1 // pred_fallthru
      _
    // Predicated region
    $region10: #{tpu_custom_call.1} parent=1 // pred_check
      _
    $region11: #{tpu_custom_call.1} parent=1 // pred_check_branch
      %38 = sbr.rel (0) target = $region13
    $region12: #{tpu_custom_call.1} parent=1 // pred_region
      _
    $region13: #{tpu_custom_call.1} parent=1 // pred_fallthru
      _
    // Predicated region
    $region14: #{tpu_custom_call.1} parent=1 // pred_check
      _
    $region15: #{tpu_custom_call.1} parent=1 // pred_check_branch
      %40 = sbr.rel (0) target = $region17
    $region16: #{tpu_custom_call.1} parent=1 // pred_region
      %42 = vsyncadd [#allocation6], 0
      %s43 = sshll.u32 %s3, 4
      %s44 = int_to_ptr.hbm [resolvable:$true] %s43
      %s45 = sshll.u32 [#allocation7], 4
      %s46 = int_to_ptr.vmem [resolvable:$true] %s45
      %51 = dma.hbm_to_vmem [thread:$0]  %s44, 512, %s46, [#allocation6], 128, 128, 8
    $region17: #{tpu_custom_call.1} parent=1 // pred_fallthru
      _
    // Predicated region
    $region18: #{tpu_custom_call.1} parent=1 // pred_check
      _
    $region19: #{tpu_custom_call.1} parent=1 // pred_check_branch
      %53 = sbr.rel (0) target = $region21
    $region20: #{tpu_custom_call.1} parent=1 // pred_region
      _
    $region21: #{tpu_custom_call.1} parent=1 // pred_fallthru
      _
    // Predicated region
    $region22: #{tpu_custom_call.1} parent=1 // pred_check
      _
    $region23: #{tpu_custom_call.1} parent=1 // pred_check_branch
      %55 = sbr.rel (0) target = $region25
    $region24: #{tpu_custom_call.1} parent=1 // pred_region
      %57 = dma.done [#allocation3], 128
    $region25: #{tpu_custom_call.1} parent=1 // pred_fallthru
      _
    // Predicated region
    $region26: #{tpu_custom_call.1} parent=1 // pred_check
      _
    $region27: #{tpu_custom_call.1} parent=1 // pred_check_branch
      %59 = sbr.rel (0) target = $region29
    $region28: #{tpu_custom_call.1} parent=1 // pred_region
      %61 = dma.done [#allocation6], 256
    $region29: #{tpu_custom_call.1} parent=1 // pred_fallthru
      _
    // Predicated region
    $region30: #{tpu_custom_call.1} parent=1 // pred_check
      _
    $region31: #{tpu_custom_call.1} parent=1 // pred_check_branch
      %63 = sbr.rel (0) target = $region33
    $region32: #{tpu_custom_call.1} parent=1 // pred_region
      %65 = dma.done [#allocation6], 512
    $region33: #{tpu_custom_call.1} parent=1 // pred_fallthru
      _
    %v66 = vld [vmem:[#allocation2] sm:$0xff]
    %v67 = vld [vmem:[#allocation5] sm:$0xff]
    %v68 = vld [vmem:[#allocation5 + $0x8] sm:$0xff]
    %v69 = vld [vmem:[%s2] sm:$0x1]
    %v71 = vperm.slane %v69, 0
    %vm73 = vcmask 130048
    %v75 = vsel %vm73, %v66, 0
    %77 = vmatpush.msra.mxu0 0.0
    %78 = vmatpush.msra.mxu0 0.0
    %79 = vmatpush.msra.mxu0 0.0
    %80 = vmatpush.msra.mxu0 0.0
    %81 = vmatpush.msra.mxu0 0.0
    %82 = vmatpush.msra.mxu0 0.0
    %83 = vmatpush.msra.mxu0 0.0
    %84 = vmatpush.msra.mxu0 0.0
    %85 = vmatpush.msra.mxu0 0.0
    %86 = vmatpush.msra.mxu0 0.0
    %87 = vmatpush.msra.mxu0 0.0
    %88 = vmatpush.msra.mxu0 0.0
    %89 = vmatpush.msra.mxu0 0.0
    %90 = vmatpush.msra.mxu0 0.0
    %91 = vmatpush.msra.mxu0 %v68
    %92 = vmatpush.msra.mxu0 %v67
    %93 = vmatmul.f32.gmra.mxu0 %v75
    %v94 = vpop.f32.mrf.mxu0
    %v95 = vadd.f32 %v71, %v94
    %96 = vdwg.mxu0
    %v97 = vmax.f32 %v95, 0.0
    %v98 = vld [vmem:[#allocation7] sm:$0xff]
    %v99 = vld [vmem:[#allocation7 + $0x8] sm:$0xff]
    %v100 = vld [vmem:[#allocation7 + $0x10] sm:$0xff]
    %v101 = vld [vmem:[#allocation7 + $0x18] sm:$0xff]
    %v102 = vld [vmem:[%s4] sm:$0x1]
    %v104 = vperm.slane %v102, 0
    %vm106 = vcmask 261120
    %v108 = vsel %vm106, %v97, 0
    %110 = vmatpush.msra.mxu0 0.0
    %111 = vmatpush.msra.mxu0 0.0
    %112 = vmatpush.msra.mxu0 0.0
    %113 = vmatpush.msra.mxu0 0.0
    %114 = vmatpush.msra.mxu0 0.0
    %115 = vmatpush.msra.mxu0 0.0
    %116 = vmatpush.msra.mxu0 0.0
    %117 = vmatpush.msra.mxu0 0.0
    %118 = vmatpush.msra.mxu0 0.0
    %119 = vmatpush.msra.mxu0 0.0
    %120 = vmatpush.msra.mxu0 0.0
    %121 = vmatpush.msra.mxu0 0.0
    %122 = vmatpush.msra.mxu0 %v101
    %123 = vmatpush.msra.mxu0 %v100
    %124 = vmatpush.msra.mxu0 %v99
    %125 = vmatpush.msra.mxu0 %v98
    %126 = vmatmul.f32.gmra.mxu0 %v108
    %v127 = vpop.f32.mrf.mxu0
    %v128 = vadd.f32 %v104, %v127
    %129 = vdwg.mxu0
    %130 = vst [vmem:[#allocation8] sm:$0xff] %v128
    // Predicated region
    $region34: #{tpu_custom_call.1} parent=1 // pred_check
      _
    $region35: #{tpu_custom_call.1} parent=1 // pred_check_branch
      %132 = sbr.rel (0) target = $region37
    $region36: #{tpu_custom_call.1} parent=1 // pred_region
      %134 = vsyncadd [#allocation4], 0
      %s136 = sshll.u32 [#allocation8], 4
      %s137 = int_to_ptr.vmem [resolvable:$true] %s136
      %s138 = sshll.u32 %s5, 4
      %s139 = int_to_ptr.hbm [resolvable:$true] %s138
      %141 = dma.vmem_to_hbm [thread:$0]  %s137, 128, %s139, [#allocation4]
    $region37: #{tpu_custom_call.1} parent=1 // pred_fallthru
      _
    // Predicated region
    $region38: #{tpu_custom_call.1} parent=1 // pred_check
      _
    $region39: #{tpu_custom_call.1} parent=1 // pred_check_branch
      %143 = sbr.rel (0) target = $region41
    $region40: #{tpu_custom_call.1} parent=1 // pred_region
      %145 = dma.done [#allocation4], 128
    $region41: #{tpu_custom_call.1} parent=1 // pred_fallthru
      _
    %146 = vsyncpa [#allocation3], 1
    %147 = vsyncpa [#allocation6], 1
    %148 = vsyncpa [#allocation4], 1

</llo_original>
